<compile_context>
chip_gen: v7x
topology: tpu7x:2x2x1
jax: 0.10.0
libtpu: 0.0.40
codegen_flags: <defaults>
</compile_context>

<pallas_src>
import functools

import jax
import jax.numpy as jnp
from jax.experimental import pallas as pl
from jax.experimental.pallas import tpu as pltpu
from jax.scipy.linalg import block_diag


def _mha_kernel(x_ref, w_ref, b_ref, o_ref, *, n_heads, d_head):
    """One batch-block of MHA.

    x_ref : (B_blk, S, d)   input sequences (feature-last)
    w_ref : (d, 3*d)        block-diagonal fused QKV weight (q cols pre-scaled)
    b_ref : (1, 3*d)        fused QKV bias (q part pre-scaled)
    o_ref : (B_blk, S, d)   lane-dense output, heads concatenated on the last axis
    """
    b_blk, S, d = x_ref.shape

    # Fused QKV projection for all heads in one MXU matmul.
    # Collapsing (B_blk, S) -> B_blk*S only touches the sublane axis (cheap).
    x2 = x_ref[...].reshape(b_blk * S, d)
    qkv = jnp.dot(x2, w_ref[...], preferred_element_type=jnp.float32) + b_ref[...]
    qkv = qkv.reshape(b_blk, S, 3 * d)

    q = qkv[..., 0:d]              # heads concatenated on lanes, already / sqrt(dh)
    k = qkv[..., d:2 * d]
    v = qkv[..., 2 * d:3 * d]

    for h in range(n_heads):                       # unrolled: n_heads is static
        lo, hi = h * d_head, (h + 1) * d_head
        q_h = q[..., lo:hi]                        # (B_blk, S, d_head)
        k_h = k[..., lo:hi]
        v_h = v[..., lo:hi]

        # q @ k^T batched over the block's batch dim; no explicit transpose.
        s = jnp.einsum('bqd,bkd->bqk', q_h, k_h,
                       preferred_element_type=jnp.float32)      # (B_blk, S, S)

        # Numerically-stable softmax along the last axis (exact reciprocal
        # to hold the 1e-5 tolerance).
        m = jnp.max(s, axis=-1, keepdims=True)
        e = jnp.exp(s - m)
        attn = e * pl.reciprocal(jnp.sum(e, axis=-1, keepdims=True), approx=False)

        out_h = jnp.einsum('bqk,bkd->bqd', attn, v_h,
                           preferred_element_type=jnp.float32)  # (B_blk, S, d_head)

        # Write this head's columns straight into the lane-dense output block:
        # no head_outs list, no end-of-kernel concatenate, bounded live ranges.
        o_ref[:, :, lo:hi] = out_h.astype(o_ref.dtype)


def _pick_batch_block(B, S, d, budget_bytes=8 << 20):
    """Largest batch block that fits a VMEM budget, keeping >=2 grid steps
    (v7x has 2 TensorCores sharing the 'parallel' grid axis)."""
    per_seq_bytes = 4 * (2 * S * d      # x block + o block
                         + 3 * S * d    # fused qkv
                         + 3 * S * S)   # scores / exp / attn transients (1 head)
    b_blk = max(1, min(B, budget_bytes // max(per_seq_bytes, 1)))
    if B >= 2:
        b_blk = max(1, min(b_blk, B // 2))
    while B % b_blk:                    # keep blocks uniform (no padded tail)
        b_blk -= 1
    return b_blk


def mha_forward(sequences, wq, bq, wk, bk, wv, bv, n_heads):
    """sequences: (B, S, d) float32.
    wq/wk/wv: (H, d_head, d_head) — PyTorch Linear weight (out,in) per head.
    bq/bk/bv: (H, d_head).
    Returns (B, S, d), matching the PyTorch MHA.forward output."""
    B, S, d = sequences.shape
    d_head = d // n_heads
    scale = 1.0 / (d_head ** 0.5)

    # Block-diagonal fused QKV weight: y = x @ W_fused yields [q | k | v] for all
    # heads at once. PyTorch Linear computes x @ W.T, so transpose per head.
    # The 1/sqrt(d_head) attention scale is folded into the q columns / bias.
    wq_bd = block_diag(*[wq[h].T * scale for h in range(n_heads)])   # (d, d)
    wk_bd = block_diag(*[wk[h].T for h in range(n_heads)])
    wv_bd = block_diag(*[wv[h].T for h in range(n_heads)])
    w_fused = jnp.concatenate([wq_bd, wk_bd, wv_bd], axis=1)         # (d, 3d)
    b_fused = jnp.concatenate(
        [bq.reshape(-1) * scale, bk.reshape(-1), bv.reshape(-1)]
    ).reshape(1, 3 * d)                                              # (1, 3d)

    b_blk = _pick_batch_block(B, S, d)
    grid = (B // b_blk,)

    # Explicit VMEM limit with headroom (v7x physical VMEM is only 64 MiB).
    blk_bytes = 4 * b_blk * S * d
    transient_bytes = 4 * b_blk * (3 * S * d + 3 * S * S + 4 * S * d_head)
    weight_bytes = 4 * (d * 3 * d + 3 * d)
    est = 2 * (2 * blk_bytes) + 2 * weight_bytes + transient_bytes
    vmem_limit = int(min(max(32 << 20, 2 * est), 48 << 20))

    kernel = functools.partial(_mha_kernel, n_heads=n_heads, d_head=d_head)

    x_spec = pl.BlockSpec((b_blk, S, d), lambda i: (i, 0, 0))
    # Full-array blocks with a constant index_map: weights/bias are DMA'd once
    # and stay resident across all grid steps. (Footprint is tiny, so default
    # double-buffering of these constant blocks is not worth overriding.)
    w_spec = pl.BlockSpec((d, 3 * d), lambda i: (0, 0))
    b_spec = pl.BlockSpec((1, 3 * d), lambda i: (0, 0))
    o_spec = pl.BlockSpec((b_blk, S, d), lambda i: (i, 0, 0))

    return pl.pallas_call(
        kernel,
        out_shape=jax.ShapeDtypeStruct((B, S, d), sequences.dtype),
        grid_spec=pltpu.PrefetchScalarGridSpec(
            num_scalar_prefetch=0,
            grid=grid,
            in_specs=[x_spec, w_spec, b_spec],
            out_specs=o_spec,
        ),
        compiler_params=pltpu.CompilerParams(
            dimension_semantics=("parallel",),
            vmem_limit_bytes=vmem_limit),
    )(sequences, w_fused, b_fused)


def mha_reference(sequences, wq, bq, wk, bk, wv, bv, n_heads):
    """Pure-JAX reference mirroring the PyTorch loop semantics."""
    B, S, d = sequences.shape
    d_head = d // n_heads
    outs = []
    for b in range(B):
        heads = []
        for h in range(n_heads):
            seq = sequences[b, :, h * d_head:(h + 1) * d_head]
            q = seq @ wq[h].T + bq[h]
            k = seq @ wk[h].T + bk[h]
            v = seq @ wv[h].T + bv[h]
            pre = q @ k.T / (d_head ** 0.5)
            attn = jax.nn.softmax(pre, axis=-1)
            heads.append(attn @ v)
        outs.append(jnp.concatenate(heads, axis=-1))
    return jnp.stack(outs, axis=0)


if __name__ == "__main__":
    B, S, d, n_heads = 2, 8, 32, 2
    d_head = d // n_heads

    key = jax.random.PRNGKey(0)
    ks = jax.random.split(key, 7)
    sequences = jax.random.normal(ks[0], (B, S, d), dtype=jnp.float32)

    # Deterministic "Linear" parameters (shape matches nn.Linear(d_head, d_head)).
    bound = 1.0 / (d_head ** 0.5)
    wq = jax.random.uniform(ks[1], (n_heads, d_head, d_head), jnp.float32, -bound, bound)
    wk = jax.random.uniform(ks[2], (n_heads, d_head, d_head), jnp.float32, -bound, bound)
    wv = jax.random.uniform(ks[3], (n_heads, d_head, d_head), jnp.float32, -bound, bound)
    bq = jax.random.uniform(ks[4], (n_heads, d_head), jnp.float32, -bound, bound)
    bk = jax.random.uniform(ks[5], (n_heads, d_head), jnp.float32, -bound, bound)
    bv = jax.random.uniform(ks[6], (n_heads, d_head), jnp.float32, -bound, bound)

    out = mha_forward(sequences, wq, bq, wk, bk, wv, bv, n_heads)
    out = jax.block_until_ready(out)

    ref = mha_reference(sequences, wq, bq, wk, bk, wv, bv, n_heads)
    assert out.shape == (B, S, d), out.shape
    assert jnp.allclose(out, ref, atol=1e-5, rtol=1e-5), float(jnp.max(jnp.abs(out - ref)))

    print("KERNEL_OK")
</pallas_src>

<mosaic_0001>
module attributes {stable_mosaic.version = 11 : i64} {
  func.func @_mha_kernel(%arg0: i32, %arg1: memref<1x8x32xf32, #tpu.memory_space<vmem>>, %arg2: memref<32x96xf32, #tpu.memory_space<vmem>>, %arg3: memref<1x96xf32, #tpu.memory_space<vmem>>, %arg4: memref<1x8x32xf32, #tpu.memory_space<vmem>>) attributes {dimension_semantics = [#tpu.dimension_semantics<parallel>], iteration_bounds = array<i64: 2>, scalar_prefetch = 0 : i64, scratch_operands = 0 : i64, tpu.core_type = #tpu.core_type<tc>, window_params = [{transform_indices = @transform_0, window_bounds = array<i64: 1, 8, 32>}, {pipeline_mode = #tpu.pipeline_mode<synchronous>, transform_indices = @transform_1, window_bounds = array<i64: 32, 96>}, {pipeline_mode = #tpu.pipeline_mode<synchronous>, transform_indices = @transform_2, window_bounds = array<i64: 1, 96>}, {transform_indices = @transform_3, window_bounds = array<i64: 1, 8, 32>}]} {
    %c0 = arith.constant 0 : index
    %c0_0 = arith.constant 0 : index
    %c0_1 = arith.constant 0 : index
    %0 = vector.load %arg1[%c0, %c0_0, %c0_1] : memref<1x8x32xf32, #tpu.memory_space<vmem>>, vector<1x8x32xf32>
    %1 = vector.shape_cast %0 : vector<1x8x32xf32> to vector<8x32xf32>
    %c0_2 = arith.constant 0 : index
    %c0_3 = arith.constant 0 : index
    %2 = vector.load %arg2[%c0_2, %c0_3] : memref<32x96xf32, #tpu.memory_space<vmem>>, vector<32x96xf32>
    %cst = arith.constant dense<0.000000e+00> : vector<8x96xf32>
    %3 = tpu.matmul %1, %2, %cst {dimension_numbers = #tpu.dot_dimension_numbers<[1], [0], [0], [1], [0, 0, 1, 1], [], []>} : vector<8x32xf32>, vector<32x96xf32>, vector<8x96xf32> -> vector<8x96xf32>
    %c0_4 = arith.constant 0 : index
    %c0_5 = arith.constant 0 : index
    %4 = vector.load %arg3[%c0_4, %c0_5] : memref<1x96xf32, #tpu.memory_space<vmem>>, vector<1x96xf32>
    %5 = vector.broadcast %4 : vector<1x96xf32> to vector<8x96xf32>
    %6 = arith.addf %3, %5 : vector<8x96xf32>
    %7 = vector.shape_cast %6 : vector<8x96xf32> to vector<1x8x96xf32>
    %8 = vector.extract_strided_slice %7 {offsets = [0, 0, 0], sizes = [1, 8, 32], strides = [1, 1, 1]} : vector<1x8x96xf32> to vector<1x8x32xf32>
    %9 = vector.extract_strided_slice %7 {offsets = [0, 0, 32], sizes = [1, 8, 32], strides = [1, 1, 1]} : vector<1x8x96xf32> to vector<1x8x32xf32>
    %10 = vector.extract_strided_slice %7 {offsets = [0, 0, 64], sizes = [1, 8, 32], strides = [1, 1, 1]} : vector<1x8x96xf32> to vector<1x8x32xf32>
    %11 = vector.extract_strided_slice %8 {offsets = [0, 0, 0], sizes = [1, 8, 16], strides = [1, 1, 1]} : vector<1x8x32xf32> to vector<1x8x16xf32>
    %12 = vector.extract_strided_slice %9 {offsets = [0, 0, 0], sizes = [1, 8, 16], strides = [1, 1, 1]} : vector<1x8x32xf32> to vector<1x8x16xf32>
    %13 = vector.extract_strided_slice %10 {offsets = [0, 0, 0], sizes = [1, 8, 16], strides = [1, 1, 1]} : vector<1x8x32xf32> to vector<1x8x16xf32>
    "tpu.trace_start"() <{level = 10 : i32, message = "bqd,bkd->bqk"}> : () -> ()
    %cst_6 = arith.constant dense<0.000000e+00> : vector<1x8x8xf32>
    %14 = tpu.matmul %11, %12, %cst_6 {dimension_numbers = #tpu.dot_dimension_numbers<[2], [2], [1], [1], [0, 0, 0, 1, 1, 1], [0], [0]>} : vector<1x8x16xf32>, vector<1x8x16xf32>, vector<1x8x8xf32> -> vector<1x8x8xf32>
    "tpu.trace_stop"() : () -> ()
    %cst_7 = arith.constant dense<0xFF800000> : vector<1x8xf32>
    %15 = vector.multi_reduction <maximumf>, %14, %cst_7 [2] : vector<1x8x8xf32> to vector<1x8xf32>
    %16 = vector.shape_cast %15 : vector<1x8xf32> to vector<1x8x1xf32>
    %17 = vector.broadcast %16 : vector<1x8x1xf32> to vector<1x8x8xf32>
    %18 = arith.subf %14, %17 : vector<1x8x8xf32>
    %19 = math.exp %18 : vector<1x8x8xf32>
    %cst_8 = arith.constant dense<0.000000e+00> : vector<1x8xf32>
    %20 = vector.multi_reduction <add>, %19, %cst_8 [2] : vector<1x8x8xf32> to vector<1x8xf32>
    %21 = vector.shape_cast %20 : vector<1x8xf32> to vector<1x8x1xf32>
    %22 = tpu.reciprocal %21 : vector<1x8x1xf32> -> vector<1x8x1xf32>
    %23 = vector.broadcast %22 : vector<1x8x1xf32> to vector<1x8x8xf32>
    %24 = arith.mulf %19, %23 : vector<1x8x8xf32>
    "tpu.trace_start"() <{level = 10 : i32, message = "bqk,bkd->bqd"}> : () -> ()
    %cst_9 = arith.constant dense<0.000000e+00> : vector<1x8x16xf32>
    %25 = tpu.matmul %24, %13, %cst_9 {dimension_numbers = #tpu.dot_dimension_numbers<[2], [1], [1], [2], [0, 0, 0, 1, 1, 2], [0], [0]>} : vector<1x8x8xf32>, vector<1x8x16xf32>, vector<1x8x16xf32> -> vector<1x8x16xf32>
    "tpu.trace_stop"() : () -> ()
    %c0_10 = arith.constant 0 : index
    %c0_11 = arith.constant 0 : index
    %c0_12 = arith.constant 0 : index
    %26 = vector.load %arg4[%c0_10, %c0_11, %c0_12] : memref<1x8x32xf32, #tpu.memory_space<vmem>>, vector<1x8x16xf32>
    tpu.vector_store %arg4[%c0_10, %c0_11, %c0_12], %25 {strides = array<i32>} : memref<1x8x32xf32, #tpu.memory_space<vmem>>, vector<1x8x16xf32>,
    %27 = vector.extract_strided_slice %8 {offsets = [0, 0, 16], sizes = [1, 8, 16], strides = [1, 1, 1]} : vector<1x8x32xf32> to vector<1x8x16xf32>
    %28 = vector.extract_strided_slice %9 {offsets = [0, 0, 16], sizes = [1, 8, 16], strides = [1, 1, 1]} : vector<1x8x32xf32> to vector<1x8x16xf32>
    %29 = vector.extract_strided_slice %10 {offsets = [0, 0, 16], sizes = [1, 8, 16], strides = [1, 1, 1]} : vector<1x8x32xf32> to vector<1x8x16xf32>
    "tpu.trace_start"() <{level = 10 : i32, message = "bqd,bkd->bqk"}> : () -> ()
    %cst_13 = arith.constant dense<0.000000e+00> : vector<1x8x8xf32>
    %30 = tpu.matmul %27, %28, %cst_13 {dimension_numbers = #tpu.dot_dimension_numbers<[2], [2], [1], [1], [0, 0, 0, 1, 1, 1], [0], [0]>} : vector<1x8x16xf32>, vector<1x8x16xf32>, vector<1x8x8xf32> -> vector<1x8x8xf32>
    "tpu.trace_stop"() : () -> ()
    %cst_14 = arith.constant dense<0xFF800000> : vector<1x8xf32>
    %31 = vector.multi_reduction <maximumf>, %30, %cst_14 [2] : vector<1x8x8xf32> to vector<1x8xf32>
    %32 = vector.shape_cast %31 : vector<1x8xf32> to vector<1x8x1xf32>
    %33 = vector.broadcast %32 : vector<1x8x1xf32> to vector<1x8x8xf32>
    %34 = arith.subf %30, %33 : vector<1x8x8xf32>
    %35 = math.exp %34 : vector<1x8x8xf32>
    %cst_15 = arith.constant dense<0.000000e+00> : vector<1x8xf32>
    %36 = vector.multi_reduction <add>, %35, %cst_15 [2] : vector<1x8x8xf32> to vector<1x8xf32>
    %37 = vector.shape_cast %36 : vector<1x8xf32> to vector<1x8x1xf32>
    %38 = tpu.reciprocal %37 : vector<1x8x1xf32> -> vector<1x8x1xf32>
    %39 = vector.broadcast %38 : vector<1x8x1xf32> to vector<1x8x8xf32>
    %40 = arith.mulf %35, %39 : vector<1x8x8xf32>
    "tpu.trace_start"() <{level = 10 : i32, message = "bqk,bkd->bqd"}> : () -> ()
    %cst_16 = arith.constant dense<0.000000e+00> : vector<1x8x16xf32>
    %41 = tpu.matmul %40, %29, %cst_16 {dimension_numbers = #tpu.dot_dimension_numbers<[2], [1], [1], [2], [0, 0, 0, 1, 1, 2], [0], [0]>} : vector<1x8x8xf32>, vector<1x8x16xf32>, vector<1x8x16xf32> -> vector<1x8x16xf32>
    "tpu.trace_stop"() : () -> ()
    %c0_17 = arith.constant 0 : index
    %c0_18 = arith.constant 0 : index
    %c16 = arith.constant 16 : index
    %42 = vector.load %arg4[%c0_17, %c0_18, %c16] : memref<1x8x32xf32, #tpu.memory_space<vmem>>, vector<1x8x16xf32>
    tpu.vector_store %arg4[%c0_17, %c0_18, %c16], %41 {strides = array<i32>} : memref<1x8x32xf32, #tpu.memory_space<vmem>>, vector<1x8x16xf32>,
    return
  }
  func.func @transform_0(%arg0: i32) -> (i32, i32, i32) {
    %c0_i32 = arith.constant 0 : i32
    %c0_i32_0 = arith.constant 0 : i32
    %c0_i32_1 = arith.constant 0 : i32
    return %arg0, %c0_i32, %c0_i32_0 : i32, i32, i32
  }
  func.func @transform_1(%arg0: i32) -> (i32, i32) {
    %c0_i32 = arith.constant 0 : i32
    %c0_i32_0 = arith.constant 0 : i32
    %c0_i32_1 = arith.constant 0 : i32
    return %c0_i32, %c0_i32_0 : i32, i32
  }
  func.func @transform_2(%arg0: i32) -> (i32, i32) {
    %c0_i32 = arith.constant 0 : i32
    %c0_i32_0 = arith.constant 0 : i32
    %c0_i32_1 = arith.constant 0 : i32
    return %c0_i32, %c0_i32_0 : i32, i32
  }
  func.func @transform_3(%arg0: i32) -> (i32, i32, i32) {
    %c0_i32 = arith.constant 0 : i32
    %c0_i32_0 = arith.constant 0 : i32
    %c0_i32_1 = arith.constant 0 : i32
    return %arg0, %c0_i32, %c0_i32_0 : i32, i32, i32
  }
}

</mosaic_0001>

<llo_original>
// kernel: tpu_custom_call.1
$region0: #{tpu_custom_call.1}
  #allocation0 [shape = 'u32[]', space=smem, size = 0x4, offset = 0x4, fixed_abs, tag = 'smem constant byte address 0x4 - core index']
  #allocation1 [shape = 'u32[144,128]{1,0:T(1,128)}', space=vmem, size = 0x12000, scoped, tag = 'internal scratch']
  %s0 = inlined_call_operand.hbm [shape: f32[2,8,32], index: 0, kind: input, shape index: {}]
  %s1 = inlined_call_operand.hbm [shape: f32[32,96], index: 1, kind: input, shape index: {}]
  %s2 = inlined_call_operand.vmem [shape: f32[1,96], index: 2, kind: input, shape index: {}]
  %s3 = inlined_call_operand.hbm [shape: f32[2,8,32], index: 3, kind: output, shape index: {}]
  %s4 = sld [smem:[#allocation0]]
  $region53: #{tpu_custom_call.1} parent=0
    _
  %s6 = ssub.s32 1, %s4
  %s7 = scalar_select 0, %s6, %s4
  $region1: #{tpu_custom_call.1} parent=0
    #allocation2 [shape = 'u8[8192]{0}', space=vmem, size = 0x2000, scoped, tag = 'input window, operand 0']
    #allocation3 [shape = 's32[2]{0}', space=sflag, size = 0x8, scoped, tag = 'scoped memory for tpu_custom_call.1']
    #allocation4 [shape = 's32[2]{0}', space=sflag, size = 0x8, scoped, tag = 'scoped memory for tpu_custom_call.1']
    #allocation5 [shape = 'u8[16384]{0}', space=vmem, size = 0x4000, scoped, tag = 'input window, operand 1, single buffered']
    #allocation6 [shape = 's32[1]{0}', space=sflag, size = 0x4, scoped, tag = 'scoped memory for tpu_custom_call.1']
    #allocation7 [shape = 'u8[8192]{0}', space=vmem, size = 0x2000, scoped, tag = 'output window, operand 0']
    %8 = vsyncpa [#allocation3], 0
    %s9 = scalar_lea.sflag [#allocation3], 1
    %10 = vsyncpa %s9, 0
    %11 = vsyncpa [#allocation6], 0
    %12 = vsyncpa [#allocation4], 0
    %s13 = scalar_lea.sflag [#allocation4], 1
    %14 = vsyncpa %s13, 0
    loop: start=0, step=1, limit=4
    $region2: #{tpu_custom_call.1} parent=1 // loop_pre_header
      _
    $region3: #{tpu_custom_call.1} parent=1 // loop_header
      %s16 = sphi 0, %s20
      %p17 = scmp.ge.s32.totalorder %s16, 4
      %s26 = sphi 0, %s28
      %s29 = sphi 0, %s26
      %s30 = sphi 0, %s29
      %s46 = sphi 0, %s30
      %s50 = sphi 0, %s50
      %s52 = sphi 0, %s50
      %s53 = sphi 0, %s52
      %s67 = sphi 0, %s53
      %s71 = sphi 0, %s71
      %s73 = sphi 0, %s71
      %s74 = sphi 0, %s73
      %s88 = sphi 0, %s74
      %s94 = sphi 0, %s96
      %s97 = sphi 0, %s94
      %s98 = sphi 0, %s97
      %s114 = sphi 0, %s98
    $region4: #{tpu_custom_call.1} parent=1 // loop_header_branch
      %19 = sbr.rel (%p17) target = $region8
    $region5: #{tpu_custom_call.1} parent=1 // loop_body
      %s21 = ssub.s32 %s16, 1
      %s22 = ssub.s32 %s16, 2
      %s23 = sadd.s32 %s16, 1
      %s24 = ssub.s32 %s16, %s23
      %p25 = scmp.eq.s32.totalorder %s24, 0
      %s27 = sadd.s32 %s26, 1
      %s28 = scalar_select %p25, %s26, %s27
      %p31 = pneg %p25
      %p32 = scmp.eq.s32.totalorder %s16, 1
      %p33 = por %p31, %p32
      %p34 = scmp.ne.s32.totalorder %s26, %s29
      %p35 = scmp.eq.s32.totalorder %s16, 0
      %p36 = por %p34, %p35
      %p37 = scmp.ne.s32.totalorder %s26, %s29
      %p38 = scmp.eq.s32.totalorder %s21, 1
      %p39 = por %p37, %p38
      %p40 = scmp.ne.s32.totalorder %s29, %s30
      %p41 = scmp.eq.s32.totalorder %s21, 0
      %p42 = por %p40, %p41
      %p43 = scmp.ne.s32.totalorder %s29, %s30
      %p44 = scmp.eq.s32.totalorder %s22, 1
      %p45 = por %p43, %p44
      %p47 = scmp.ne.s32.totalorder %s30, %s46
      %p48 = scmp.eq.s32.totalorder %s22, 0
      %p49 = por %p47, %p48
      %s51 = sadd.s32 %s50, 1
      %p54 = scmp.eq.s32.totalorder %s16, 1
      %p55 = scmp.ne.s32.totalorder %s50, %s52
      %p56 = scmp.eq.s32.totalorder %s16, 0
      %p57 = por %p55, %p56
      %p58 = scmp.ne.s32.totalorder %s50, %s52
      %p59 = scmp.eq.s32.totalorder %s21, 1
      %p60 = por %p58, %p59
      %p61 = scmp.ne.s32.totalorder %s52, %s53
      %p62 = scmp.eq.s32.totalorder %s21, 0
      %p63 = por %p61, %p62
      %p64 = scmp.ne.s32.totalorder %s52, %s53
      %p65 = scmp.eq.s32.totalorder %s22, 1
      %p66 = por %p64, %p65
      %p68 = scmp.ne.s32.totalorder %s53, %s67
      %p69 = scmp.eq.s32.totalorder %s22, 0
      %p70 = por %p68, %p69
      %s72 = sadd.s32 %s71, 1
      %p75 = scmp.eq.s32.totalorder %s16, 1
      %p76 = scmp.ne.s32.totalorder %s71, %s73
      %p77 = scmp.eq.s32.totalorder %s16, 0
      %p78 = por %p76, %p77
      %p79 = scmp.ne.s32.totalorder %s71, %s73
      %p80 = scmp.eq.s32.totalorder %s21, 1
      %p81 = por %p79, %p80
      %p82 = scmp.ne.s32.totalorder %s73, %s74
      %p83 = scmp.eq.s32.totalorder %s21, 0
      %p84 = por %p82, %p83
      %p85 = scmp.ne.s32.totalorder %s73, %s74
      %p86 = scmp.eq.s32.totalorder %s22, 1
      %p87 = por %p85, %p86
      %p89 = scmp.ne.s32.totalorder %s74, %s88
      %p90 = scmp.eq.s32.totalorder %s22, 0
      %p91 = por %p89, %p90
      %s92 = ssub.s32 %s16, %s23
      %p93 = scmp.eq.s32.totalorder %s92, 0
      %s95 = sadd.s32 %s94, 1
      %s96 = scalar_select %p93, %s94, %s95
      %p99 = pneg %p93
      %p100 = scmp.eq.s32.totalorder %s16, 1
      %p101 = por %p99, %p100
      %p102 = scmp.ne.s32.totalorder %s94, %s97
      %p103 = scmp.eq.s32.totalorder %s16, 0
      %p104 = por %p102, %p103
      %p105 = scmp.ne.s32.totalorder %s94, %s97
      %p106 = scmp.eq.s32.totalorder %s21, 1
      %p107 = por %p105, %p106
      %p108 = scmp.ne.s32.totalorder %s97, %s98
      %p109 = scmp.eq.s32.totalorder %s21, 0
      %p110 = por %p108, %p109
      %p111 = scmp.ne.s32.totalorder %s97, %s98
      %p112 = scmp.eq.s32.totalorder %s22, 1
      %p113 = por %p111, %p112
      %p115 = scmp.ne.s32.totalorder %s98, %s114
      %p116 = scmp.eq.s32.totalorder %s22, 0
      %p117 = por %p115, %p116
      %p118 = scmp.le.s32.totalorder 1, %s16
      %p119 = scmp.lt.s32.totalorder %s16, 3
      %p120 = pnand %p118, %p119
      %p121 = pneg %p120
      // Predicated region
      $region9: #{tpu_custom_call.1} parent=5 // pred_check
        _
      $region10: #{tpu_custom_call.1} parent=5 // pred_check_branch
        %123 = sbr.rel (%p120) target = $region12
      $region11: #{tpu_custom_call.1} parent=5 // pred_region
        %s124 = ssub.s32 %s16, 1
        // Predicated region
        $region13: #{tpu_custom_call.1} parent=11 // pred_check
          %p125 = pneg %p63
        $region14: #{tpu_custom_call.1} parent=11 // pred_check_branch
          %127 = sbr.rel (%p125) target = $region16
        $region15: #{tpu_custom_call.1} parent=11 // pred_region
          %s129 = ssub.s32 512, 512
          %130 = vsyncadd [#allocation6], %s129
          %s131 = sshll.u32 [#allocation5], 4
          %s132 = int_to_ptr.vmem [resolvable:$true] %s131
          %137 = dma.hbm_to_vmem [thread:$0]  %s1, 512, %s132, [#allocation6], 128, 128, 8
        $region16: #{tpu_custom_call.1} parent=11 // pred_fallthru
          _
        // Predicated region
        $region17: #{tpu_custom_call.1} parent=11 // pred_check
          %p138 = pneg %p84
        $region18: #{tpu_custom_call.1} parent=11 // pred_check_branch
          %140 = sbr.rel (%p138) target = $region20
        $region19: #{tpu_custom_call.1} parent=11 // pred_region
          _
        $region20: #{tpu_custom_call.1} parent=11 // pred_fallthru
          _
      $region12: #{tpu_custom_call.1} parent=5 // pred_fallthru
        _
      %p141 = scmp.lt.s32.totalorder %s16, 2
      // Predicated region
      $region21: #{tpu_custom_call.1} parent=5 // pred_check
        %p142 = pneg %p141
      $region22: #{tpu_custom_call.1} parent=5 // pred_check_branch
        %144 = sbr.rel (%p142) target = $region24
      $region23: #{tpu_custom_call.1} parent=5 // pred_region
        // Predicated region
        $region25: #{tpu_custom_call.1} parent=23 // pred_check
          %p145 = pneg %p36
        $region26: #{tpu_custom_call.1} parent=23 // pred_check_branch
          %147 = sbr.rel (%p145) target = $region28
        $region27: #{tpu_custom_call.1} parent=23 // pred_region
          %s148 = sand.u32 %s26, 1
          %s149 = scalar_lea.sflag [#allocation3], %s148
          %s150 = sand.u32 %s26, 1
          %s151 = smul.addr %s150, 8
          %s152 = scalar_lea.vmem [#allocation2], %s151
          %s154 = ssub.s32 128, 128
          %155 = vsyncadd %s149, %s154
          %s156 = smul.addr %s16, 128
          %s157 = scalar_lea.hbm %s0, %s156
          %s159 = sshll.u32 %s152, 4
          %s160 = int_to_ptr.vmem [resolvable:$true] %s159
          %162 = dma.hbm_to_vmem [thread:$0]  %s157, 128, %s160, %s149
        $region28: #{tpu_custom_call.1} parent=23 // pred_fallthru
          _
      $region24: #{tpu_custom_call.1} parent=5 // pred_fallthru
        _
      %p163 = scmp.le.s32.totalorder 1, %s16
      %p164 = scmp.lt.s32.totalorder %s16, 3
      %p165 = pnand %p163, %p164
      %p166 = pneg %p165
      // Predicated region
      $region29: #{tpu_custom_call.1} parent=5 // pred_check
        _
      $region30: #{tpu_custom_call.1} parent=5 // pred_check_branch
        %168 = sbr.rel (%p165) target = $region32
      $region31: #{tpu_custom_call.1} parent=5 // pred_region
        %s169 = ssub.s32 %s16, 1
        %s170 = sand.u32 %s29, 1
        %s171 = scalar_lea.sflag [#allocation3], %s170
        %s172 = sand.u32 %s29, 1
        %s173 = smul.addr %s172, 8
        %s174 = scalar_lea.vmem [#allocation2], %s173
        // Predicated region
        $region33: #{tpu_custom_call.1} parent=31 // pred_check
          %p175 = pneg %p42
        $region34: #{tpu_custom_call.1} parent=31 // pred_check_branch
          %177 = sbr.rel (%p175) target = $region36
        $region35: #{tpu_custom_call.1} parent=31 // pred_region
          %178 = dma.done %s171, 128
        $region36: #{tpu_custom_call.1} parent=31 // pred_fallthru
          _
        // Predicated region
        $region37: #{tpu_custom_call.1} parent=31 // pred_check
          %p179 = pneg %p63
        $region38: #{tpu_custom_call.1} parent=31 // pred_check_branch
          %181 = sbr.rel (%p179) target = $region40
        $region39: #{tpu_custom_call.1} parent=31 // pred_region
          %182 = dma.done [#allocation6], 512
        $region40: #{tpu_custom_call.1} parent=31 // pred_fallthru
          _
        %s183 = sand.u32 %s29, 1
        %s184 = scalar_lea.sflag [#allocation3], %s183
        %s185 = sand.u32 %s29, 1
        %s186 = smul.addr %s185, 8
        %s187 = scalar_lea.vmem [#allocation2], %s186
        %p188 = pneg %p42
        %p189 = pneg %p39
        %p190 = pneg %p63
        %p191 = pneg %p60
        %p192 = pneg %p84
        %p193 = pneg %p81
        %p194 = pneg %p110
        %p195 = pneg %p107
        %s196 = sand.u32 %s97, 1
        %s197 = scalar_lea.sflag [#allocation4], %s196
        %s198 = sand.u32 %s97, 1
        %s199 = smul.addr %s198, 8
        %s200 = scalar_lea.vmem [#allocation7], %s199
        %v201 = vld [vmem:[%s174] sm:$0xff]
        %v202 = vld [vmem:[#allocation5] sm:$0xff]
        %v203 = vld [vmem:[#allocation5 + $0x8] sm:$0xff]
        %v204 = vld [vmem:[#allocation5 + $0x10] sm:$0xff]
        %v205 = vld [vmem:[#allocation5 + $0x18] sm:$0xff]
        %v206 = vld [vmem:[%s2] sm:$0x1]
        %v208 = vlaneseq
        %v209 = vshrl.u32 %v208, 7
        %v210 = vsub.s32 0, %v209
        %v211 = vrot.slane %v206, %v210
        %vm213 = vcmask 261120
        %v215 = vsel %vm213, %v201, 0
        %217 = vmatprep.subr.mxu0 0.0
        %218 = vmatpush1.msra.mxu0 %v202
        %219 = vmatprep.subr.mxu0 0.0
        %220 = vmatpush1.msra.mxu0 %v203
        %221 = vmatprep.subr.mxu0 0.0
        %222 = vmatpush1.msra.mxu0 %v204
        %223 = vmatprep.subr.mxu0 0.0
        %224 = vmatpush1.msra.mxu0 %v205
        %225 = vmatprep.subr.mxu0 0.0
        %226 = vmatpush1.msra.mxu0 0.0
        %227 = vmatprep.subr.mxu0 0.0
        %228 = vmatpush1.msra.mxu0 0.0
        %229 = vmatprep.subr.mxu0 0.0
        %230 = vmatpush1.msra.mxu0 0.0
        %231 = vmatprep.subr.mxu0 0.0
        %232 = vmatpush1.msra.mxu0 0.0
        %233 = vmatprep.subr.mxu0 0.0
        %234 = vmatpush1.msra.mxu0 0.0
        %235 = vmatprep.subr.mxu0 0.0
        %236 = vmatpush1.msra.mxu0 0.0
        %237 = vmatprep.subr.mxu0 0.0
        %238 = vmatpush1.msra.mxu0 0.0
        %239 = vmatprep.subr.mxu0 0.0
        %240 = vmatpush1.msra.mxu0 0.0
        %241 = vmatprep.subr.mxu0 0.0
        %242 = vmatpush1.msra.mxu0 0.0
        %243 = vmatprep.subr.mxu0 0.0
        %244 = vmatpush1.msra.mxu0 0.0
        %245 = vmatprep.subr.mxu0 0.0
        %246 = vmatpush1.msra.mxu0 0.0
        %247 = vmatprep.subr.mxu0 0.0
        %248 = vmatpush1.msra.mxu0 0.0
        %249 = vmatprep.subr.mxu0 0.0
        %250 = vmatpush1.msra.mxu0 0.0
        %251 = vmatprep.subr.mxu0 0.0
        %252 = vmatpush1.msra.mxu0 0.0
        %253 = vmatprep.subr.mxu0 0.0
        %254 = vmatpush1.msra.mxu0 0.0
        %255 = vmatprep.subr.mxu0 0.0
        %256 = vmatpush1.msra.mxu0 0.0
        %257 = vmatprep.subr.mxu0 0.0
        %258 = vmatpush1.msra.mxu0 0.0
        %259 = vmatprep.subr.mxu0 0.0
        %260 = vmatpush1.msra.mxu0 0.0
        %261 = vmatprep.subr.mxu0 0.0
        %262 = vmatpush1.msra.mxu0 0.0
        %263 = vmatprep.subr.mxu0 0.0
        %264 = vmatpush1.msra.mxu0 0.0
        %265 = vmatprep.subr.mxu0 0.0
        %266 = vmatpush1.msra.mxu0 0.0
        %267 = vmatprep.subr.mxu0 0.0
        %268 = vmatpush1.msra.mxu0 0.0
        %269 = vmatprep.subr.mxu0 0.0
        %270 = vmatpush1.msra.mxu0 0.0
        %271 = vmatprep.subr.mxu0 0.0
        %272 = vmatpush1.msra.mxu0 0.0
        %273 = vmatprep.subr.mxu0 0.0
        %274 = vmatpush1.msra.mxu0 0.0
        %275 = vmatprep.subr.mxu0 0.0
        %276 = vmatpush1.msra.mxu0 0.0
        %277 = vmatprep.subr.mxu0 0.0
        %278 = vmatpush1.msra.mxu0 0.0
        %279 = vmatprep.subr.mxu0 0.0
        %280 = vmatpush1.msra.mxu0 0.0
        %281 = vmatprep.mubr.f32.mxu0 0.0
        %282 = vmatmul.mubr.f32.gmra.mrb[0].mxu0 %v215
        %v283 = vpop.f32.mrb[0].mxu0
        %v284 = vadd.f32 %v211, %v283
        %v285 = vpop.f32.mrb[0].mxu0
        %286 = vdwg.mxu0
        %288 = vrot.lane.b32.xlu0 %v284, 96
        %v289 = vpop.permute.xlu0 %288
        %vm290 = vcmask 130048
        %v291 = vsel %vm290, %v284, 0
        %v293 = vsel %vm290, %v289, 0
        %295 = vmatprep.subr.mxu0 0.0
        %296 = vmatpush1.xpose.msra.mxu0 %v293
        %297 = vmatprep.subr.mxu0 0.0
        %298 = vmatpush1.xpose.msra.mxu0 0.0
        %299 = vmatprep.subr.mxu0 0.0
        %300 = vmatpush1.xpose.msra.mxu0 0.0
        %301 = vmatprep.subr.mxu0 0.0
        %302 = vmatpush1.xpose.msra.mxu0 0.0
        %303 = vmatprep.subr.mxu0 0.0
        %304 = vmatpush1.xpose.msra.mxu0 0.0
        %305 = vmatprep.subr.mxu0 0.0
        %306 = vmatpush1.xpose.msra.mxu0 0.0
        %307 = vmatprep.subr.mxu0 0.0
        %308 = vmatpush1.xpose.msra.mxu0 0.0
        %309 = vmatprep.subr.mxu0 0.0
        %310 = vmatpush1.xpose.msra.mxu0 0.0
        %311 = vmatprep.subr.mxu0 0.0
        %312 = vmatpush1.xpose.msra.mxu0 0.0
        %313 = vmatprep.subr.mxu0 0.0
        %314 = vmatpush1.xpose.msra.mxu0 0.0
        %315 = vmatprep.subr.mxu0 0.0
        %316 = vmatpush1.xpose.msra.mxu0 0.0
        %317 = vmatprep.subr.mxu0 0.0
        %318 = vmatpush1.xpose.msra.mxu0 0.0
        %319 = vmatprep.subr.mxu0 0.0
        %320 = vmatpush1.xpose.msra.mxu0 0.0
        %321 = vmatprep.subr.mxu0 0.0
        %322 = vmatpush1.xpose.msra.mxu0 0.0
        %323 = vmatprep.subr.mxu0 0.0
        %324 = vmatpush1.xpose.msra.mxu0 0.0
        %325 = vmatprep.subr.mxu0 0.0
        %326 = vmatpush1.xpose.msra.mxu0 0.0
        %327 = vmatprep.subr.mxu0 0.0
        %328 = vmatpush1.xpose.msra.mxu0 0.0
        %329 = vmatprep.subr.mxu0 0.0
        %330 = vmatpush1.xpose.msra.mxu0 0.0
        %331 = vmatprep.subr.mxu0 0.0
        %332 = vmatpush1.xpose.msra.mxu0 0.0
        %333 = vmatprep.subr.mxu0 0.0
        %334 = vmatpush1.xpose.msra.mxu0 0.0
        %335 = vmatprep.subr.mxu0 0.0
        %336 = vmatpush1.xpose.msra.mxu0 0.0
        %337 = vmatprep.subr.mxu0 0.0
        %338 = vmatpush1.xpose.msra.mxu0 0.0
        %339 = vmatprep.subr.mxu0 0.0
        %340 = vmatpush1.xpose.msra.mxu0 0.0
        %341 = vmatprep.subr.mxu0 0.0
        %342 = vmatpush1.xpose.msra.mxu0 0.0
        %343 = vmatprep.subr.mxu0 0.0
        %344 = vmatpush1.xpose.msra.mxu0 0.0
        %345 = vmatprep.subr.mxu0 0.0
        %346 = vmatpush1.xpose.msra.mxu0 0.0
        %347 = vmatprep.subr.mxu0 0.0
        %348 = vmatpush1.xpose.msra.mxu0 0.0
        %349 = vmatprep.subr.mxu0 0.0
        %350 = vmatpush1.xpose.msra.mxu0 0.0
        %351 = vmatprep.subr.mxu0 0.0
        %352 = vmatpush1.xpose.msra.mxu0 0.0
        %353 = vmatprep.subr.mxu0 0.0
        %354 = vmatpush1.xpose.msra.mxu0 0.0
        %355 = vmatprep.subr.mxu0 0.0
        %356 = vmatpush1.xpose.msra.mxu0 0.0
        %357 = vmatprep.subr.mxu0 0.0
        %358 = vmatpush1.xpose.msra.mxu0 0.0
        %359 = vmatprep.mubr.f32.mxu0 0.0
        %360 = vmatmul.mubr.f32.gmra.mrb[0].mxu0 %v291
        %v361 = vpop.f32.mrb[0].mxu0
        %v362 = vadd.f32 0.0, %v361
        %v363 = vpop.f32.mrb[0].mxu0
        %364 = vdwg.mxu0
        %vm365 = vcmask 64512
        %v366 = vsel %vm365, %v362, -inf
        %367 = vmax.xlane.f32.xlu0 %v366
        %v368 = vpop.xlane.xlu0 %367
        %v369 = vsub.f32 %v362, %v368
        %v370 = vmul.f32 %v369, 1.442695
        %v371 = vpow.pop %v370
        %v372 = vsel %vm365, %v371, 0.0
        %373 = vadd.xlane.f32.xlu0 %v372
        %v374 = vpop.xlane.xlu0 %373
        %v375 = vrcp.pop %v374
        %v376 = vmul.f32 %v371, %v375
        %377 = vrot.lane.b32.xlu0 %v284, 64
        %v378 = vpop.permute.xlu0 %377
        %v381 = vsel %vm365, %v376, 0
        %383 = vmatprep.subr.mxu0 0.0
        %384 = vmatpush1.msra.mxu0 %v378
        %385 = vmatprep.subr.mxu0 0.0
        %386 = vmatpush1.msra.mxu0 0.0
        %387 = vmatprep.subr.mxu0 0.0
        %388 = vmatpush1.msra.mxu0 0.0
        %389 = vmatprep.subr.mxu0 0.0
        %390 = vmatpush1.msra.mxu0 0.0
        %391 = vmatprep.subr.mxu0 0.0
        %392 = vmatpush1.msra.mxu0 0.0
        %393 = vmatprep.subr.mxu0 0.0
        %394 = vmatpush1.msra.mxu0 0.0
        %395 = vmatprep.subr.mxu0 0.0
        %396 = vmatpush1.msra.mxu0 0.0
        %397 = vmatprep.subr.mxu0 0.0
        %398 = vmatpush1.msra.mxu0 0.0
        %399 = vmatprep.subr.mxu0 0.0
        %400 = vmatpush1.msra.mxu0 0.0
        %401 = vmatprep.subr.mxu0 0.0
        %402 = vmatpush1.msra.mxu0 0.0
        %403 = vmatprep.subr.mxu0 0.0
        %404 = vmatpush1.msra.mxu0 0.0
        %405 = vmatprep.subr.mxu0 0.0
        %406 = vmatpush1.msra.mxu0 0.0
        %407 = vmatprep.subr.mxu0 0.0
        %408 = vmatpush1.msra.mxu0 0.0
        %409 = vmatprep.subr.mxu0 0.0
        %410 = vmatpush1.msra.mxu0 0.0
        %411 = vmatprep.subr.mxu0 0.0
        %412 = vmatpush1.msra.mxu0 0.0
        %413 = vmatprep.subr.mxu0 0.0
        %414 = vmatpush1.msra.mxu0 0.0
        %415 = vmatprep.subr.mxu0 0.0
        %416 = vmatpush1.msra.mxu0 0.0
        %417 = vmatprep.subr.mxu0 0.0
        %418 = vmatpush1.msra.mxu0 0.0
        %419 = vmatprep.subr.mxu0 0.0
        %420 = vmatpush1.msra.mxu0 0.0
        %421 = vmatprep.subr.mxu0 0.0
        %422 = vmatpush1.msra.mxu0 0.0
        %423 = vmatprep.subr.mxu0 0.0
        %424 = vmatpush1.msra.mxu0 0.0
        %425 = vmatprep.subr.mxu0 0.0
        %426 = vmatpush1.msra.mxu0 0.0
        %427 = vmatprep.subr.mxu0 0.0
        %428 = vmatpush1.msra.mxu0 0.0
        %429 = vmatprep.subr.mxu0 0.0
        %430 = vmatpush1.msra.mxu0 0.0
        %431 = vmatprep.subr.mxu0 0.0
        %432 = vmatpush1.msra.mxu0 0.0
        %433 = vmatprep.subr.mxu0 0.0
        %434 = vmatpush1.msra.mxu0 0.0
        %435 = vmatprep.subr.mxu0 0.0
        %436 = vmatpush1.msra.mxu0 0.0
        %437 = vmatprep.subr.mxu0 0.0
        %438 = vmatpush1.msra.mxu0 0.0
        %439 = vmatprep.subr.mxu0 0.0
        %440 = vmatpush1.msra.mxu0 0.0
        %441 = vmatprep.subr.mxu0 0.0
        %442 = vmatpush1.msra.mxu0 0.0
        %443 = vmatprep.subr.mxu0 0.0
        %444 = vmatpush1.msra.mxu0 0.0
        %445 = vmatprep.subr.mxu0 0.0
        %446 = vmatpush1.msra.mxu0 0.0
        %447 = vmatprep.mubr.f32.mxu0 0.0
        %448 = vmatmul.mubr.f32.gmra.mrb[0].mxu0 %v381
        %v449 = vpop.f32.mrb[0].mxu0
        %v450 = vadd.f32 0.0, %v449
        %v451 = vpop.f32.mrb[0].mxu0
        %452 = vdwg.mxu0
        %453 = vst.msk [vmem:[%s200] sm:$0xff] %vm290, %v450
        %454 = vrot.lane.b32.xlu0 %v284, 112
        %v455 = vpop.permute.xlu0 %454
        %456 = vrot.lane.b32.xlu0 %v284, 80
        %v457 = vpop.permute.xlu0 %456
        %v458 = vsel %vm290, %v455, 0
        %v460 = vsel %vm290, %v457, 0
        %462 = vmatprep.subr.mxu0 0.0
        %463 = vmatpush1.xpose.msra.mxu0 %v460
        %464 = vmatprep.subr.mxu0 0.0
        %465 = vmatpush1.xpose.msra.mxu0 0.0
        %466 = vmatprep.subr.mxu0 0.0
        %467 = vmatpush1.xpose.msra.mxu0 0.0
        %468 = vmatprep.subr.mxu0 0.0
        %469 = vmatpush1.xpose.msra.mxu0 0.0
        %470 = vmatprep.subr.mxu0 0.0
        %471 = vmatpush1.xpose.msra.mxu0 0.0
        %472 = vmatprep.subr.mxu0 0.0
        %473 = vmatpush1.xpose.msra.mxu0 0.0
        %474 = vmatprep.subr.mxu0 0.0
        %475 = vmatpush1.xpose.msra.mxu0 0.0
        %476 = vmatprep.subr.mxu0 0.0
        %477 = vmatpush1.xpose.msra.mxu0 0.0
        %478 = vmatprep.subr.mxu0 0.0
        %479 = vmatpush1.xpose.msra.mxu0 0.0
        %480 = vmatprep.subr.mxu0 0.0
        %481 = vmatpush1.xpose.msra.mxu0 0.0
        %482 = vmatprep.subr.mxu0 0.0
        %483 = vmatpush1.xpose.msra.mxu0 0.0
        %484 = vmatprep.subr.mxu0 0.0
        %485 = vmatpush1.xpose.msra.mxu0 0.0
        %486 = vmatprep.subr.mxu0 0.0
        %487 = vmatpush1.xpose.msra.mxu0 0.0
        %488 = vmatprep.subr.mxu0 0.0
        %489 = vmatpush1.xpose.msra.mxu0 0.0
        %490 = vmatprep.subr.mxu0 0.0
        %491 = vmatpush1.xpose.msra.mxu0 0.0
        %492 = vmatprep.subr.mxu0 0.0
        %493 = vmatpush1.xpose.msra.mxu0 0.0
        %494 = vmatprep.subr.mxu0 0.0
        %495 = vmatpush1.xpose.msra.mxu0 0.0
        %496 = vmatprep.subr.mxu0 0.0
        %497 = vmatpush1.xpose.msra.mxu0 0.0
        %498 = vmatprep.subr.mxu0 0.0
        %499 = vmatpush1.xpose.msra.mxu0 0.0
        %500 = vmatprep.subr.mxu0 0.0
        %501 = vmatpush1.xpose.msra.mxu0 0.0
        %502 = vmatprep.subr.mxu0 0.0
        %503 = vmatpush1.xpose.msra.mxu0 0.0
        %504 = vmatprep.subr.mxu0 0.0
        %505 = vmatpush1.xpose.msra.mxu0 0.0
        %506 = vmatprep.subr.mxu0 0.0
        %507 = vmatpush1.xpose.msra.mxu0 0.0
        %508 = vmatprep.subr.mxu0 0.0
        %509 = vmatpush1.xpose.msra.mxu0 0.0
        %510 = vmatprep.subr.mxu0 0.0
        %511 = vmatpush1.xpose.msra.mxu0 0.0
        %512 = vmatprep.subr.mxu0 0.0
        %513 = vmatpush1.xpose.msra.mxu0 0.0
        %514 = vmatprep.subr.mxu0 0.0
        %515 = vmatpush1.xpose.msra.mxu0 0.0
        %516 = vmatprep.subr.mxu0 0.0
        %517 = vmatpush1.xpose.msra.mxu0 0.0
        %518 = vmatprep.subr.mxu0 0.0
        %519 = vmatpush1.xpose.msra.mxu0 0.0
        %520 = vmatprep.subr.mxu0 0.0
        %521 = vmatpush1.xpose.msra.mxu0 0.0
        %522 = vmatprep.subr.mxu0 0.0
        %523 = vmatpush1.xpose.msra.mxu0 0.0
        %524 = vmatprep.subr.mxu0 0.0
        %525 = vmatpush1.xpose.msra.mxu0 0.0
        %526 = vmatprep.mubr.f32.mxu0 0.0
        %527 = vmatmul.mubr.f32.gmra.mrb[0].mxu0 %v458
        %v528 = vpop.f32.mrb[0].mxu0
        %v529 = vadd.f32 0.0, %v528
        %v530 = vpop.f32.mrb[0].mxu0
        %531 = vdwg.mxu0
        %v532 = vsel %vm365, %v529, -inf
        %533 = vmax.xlane.f32.xlu0 %v532
        %v534 = vpop.xlane.xlu0 %533
        %v535 = vsub.f32 %v529, %v534
        %v536 = vmul.f32 %v535, 1.442695
        %v537 = vpow.pop %v536
        %v538 = vsel %vm365, %v537, 0.0
        %539 = vadd.xlane.f32.xlu0 %v538
        %v540 = vpop.xlane.xlu0 %539
        %v541 = vrcp.pop %v540
        %v542 = vmul.f32 %v537, %v541
        %543 = vrot.lane.b32.xlu0 %v284, 48
        %v544 = vpop.permute.xlu0 %543
        %v547 = vsel %vm365, %v542, 0
        %549 = vmatprep.subr.mxu0 0.0
        %550 = vmatpush1.msra.mxu0 %v544
        %551 = vmatprep.subr.mxu0 0.0
        %552 = vmatpush1.msra.mxu0 0.0
        %553 = vmatprep.subr.mxu0 0.0
        %554 = vmatpush1.msra.mxu0 0.0
        %555 = vmatprep.subr.mxu0 0.0
        %556 = vmatpush1.msra.mxu0 0.0
        %557 = vmatprep.subr.mxu0 0.0
        %558 = vmatpush1.msra.mxu0 0.0
        %559 = vmatprep.subr.mxu0 0.0
        %560 = vmatpush1.msra.mxu0 0.0
        %561 = vmatprep.subr.mxu0 0.0
        %562 = vmatpush1.msra.mxu0 0.0
        %563 = vmatprep.subr.mxu0 0.0
        %564 = vmatpush1.msra.mxu0 0.0
        %565 = vmatprep.subr.mxu0 0.0
        %566 = vmatpush1.msra.mxu0 0.0
        %567 = vmatprep.subr.mxu0 0.0
        %568 = vmatpush1.msra.mxu0 0.0
        %569 = vmatprep.subr.mxu0 0.0
        %570 = vmatpush1.msra.mxu0 0.0
        %571 = vmatprep.subr.mxu0 0.0
        %572 = vmatpush1.msra.mxu0 0.0
        %573 = vmatprep.subr.mxu0 0.0
        %574 = vmatpush1.msra.mxu0 0.0
        %575 = vmatprep.subr.mxu0 0.0
        %576 = vmatpush1.msra.mxu0 0.0
        %577 = vmatprep.subr.mxu0 0.0
        %578 = vmatpush1.msra.mxu0 0.0
        %579 = vmatprep.subr.mxu0 0.0
        %580 = vmatpush1.msra.mxu0 0.0
        %581 = vmatprep.subr.mxu0 0.0
        %582 = vmatpush1.msra.mxu0 0.0
        %583 = vmatprep.subr.mxu0 0.0
        %584 = vmatpush1.msra.mxu0 0.0
        %585 = vmatprep.subr.mxu0 0.0
        %586 = vmatpush1.msra.mxu0 0.0
        %587 = vmatprep.subr.mxu0 0.0
        %588 = vmatpush1.msra.mxu0 0.0
        %589 = vmatprep.subr.mxu0 0.0
        %590 = vmatpush1.msra.mxu0 0.0
        %591 = vmatprep.subr.mxu0 0.0
        %592 = vmatpush1.msra.mxu0 0.0
        %593 = vmatprep.subr.mxu0 0.0
        %594 = vmatpush1.msra.mxu0 0.0
        %595 = vmatprep.subr.mxu0 0.0
        %596 = vmatpush1.msra.mxu0 0.0
        %597 = vmatprep.subr.mxu0 0.0
        %598 = vmatpush1.msra.mxu0 0.0
        %599 = vmatprep.subr.mxu0 0.0
        %600 = vmatpush1.msra.mxu0 0.0
        %601 = vmatprep.subr.mxu0 0.0
        %602 = vmatpush1.msra.mxu0 0.0
        %603 = vmatprep.subr.mxu0 0.0
        %604 = vmatpush1.msra.mxu0 0.0
        %605 = vmatprep.subr.mxu0 0.0
        %606 = vmatpush1.msra.mxu0 0.0
        %607 = vmatprep.subr.mxu0 0.0
        %608 = vmatpush1.msra.mxu0 0.0
        %609 = vmatprep.subr.mxu0 0.0
        %610 = vmatpush1.msra.mxu0 0.0
        %611 = vmatprep.subr.mxu0 0.0
        %612 = vmatpush1.msra.mxu0 0.0
        %613 = vmatprep.mubr.f32.mxu0 0.0
        %614 = vmatmul.mubr.f32.gmra.mrb[0].mxu0 %v547
        %v615 = vpop.f32.mrb[0].mxu0
        %v616 = vadd.f32 0.0, %v615
        %v617 = vpop.f32.mrb[0].mxu0
        %618 = vdwg.mxu0
        %620 = vrot.lane.b32.xlu0 %v616, 16
        %v621 = vpop.permute.xlu0 %620
        %vm623 = vcmask 261248
        %624 = vst.msk [vmem:[%s200] sm:$0xff] %vm623, %v621
        %s625 = sand.u32 %s97, 1
        %s626 = scalar_lea.sflag [#allocation4], %s625
        %s627 = sand.u32 %s97, 1
        %s628 = smul.addr %s627, 8
        %s629 = scalar_lea.vmem [#allocation7], %s628
        // Predicated region
        $region41: #{tpu_custom_call.1} parent=31 // pred_check
          %p630 = pneg %p107
        $region42: #{tpu_custom_call.1} parent=31 // pred_check_branch
          %632 = sbr.rel (%p630) target = $region44
        $region43: #{tpu_custom_call.1} parent=31 // pred_region
          %s634 = ssub.s32 128, 128
          %635 = vsyncadd %s626, %s634
          %s636 = smul.addr %s21, 128
          %s637 = scalar_lea.hbm %s3, %s636
          %s639 = sshll.u32 %s629, 4
          %s640 = int_to_ptr.vmem [resolvable:$true] %s639
          %642 = dma.vmem_to_hbm [thread:$0]  %s640, 128, %s637, %s626
        $region44: #{tpu_custom_call.1} parent=31 // pred_fallthru
          _
      $region32: #{tpu_custom_call.1} parent=5 // pred_fallthru
        _
      %p643 = scmp.le.s32.totalorder 2, %s16
      // Predicated region
      $region45: #{tpu_custom_call.1} parent=5 // pred_check
        %p644 = pneg %p643
      $region46: #{tpu_custom_call.1} parent=5 // pred_check_branch
        %646 = sbr.rel (%p644) target = $region48
      $region47: #{tpu_custom_call.1} parent=5 // pred_region
        %s647 = ssub.s32 %s16, 2
        // Predicated region
        $region49: #{tpu_custom_call.1} parent=47 // pred_check
          %p648 = pneg %p113
        $region50: #{tpu_custom_call.1} parent=47 // pred_check_branch
          %650 = sbr.rel (%p648) target = $region52
        $region51: #{tpu_custom_call.1} parent=47 // pred_region
          %s651 = sand.u32 %s98, 1
          %s652 = scalar_lea.sflag [#allocation4], %s651
          %s653 = sand.u32 %s98, 1
          %s654 = smul.addr %s653, 8
          %s655 = scalar_lea.vmem [#allocation7], %s654
          %656 = dma.done %s652, 128
        $region52: #{tpu_custom_call.1} parent=47 // pred_fallthru
          _
      $region48: #{tpu_custom_call.1} parent=5 // pred_fallthru
        _
    $region6: #{tpu_custom_call.1} parent=1 // loop_footer
      %s20 = sadd.s32 1, %s16
    $region7: #{tpu_custom_call.1} parent=1 // loop_footer_branch
      %15 = sbr.rel target = $region3
    $region8: #{tpu_custom_call.1} parent=1 // loop_exit
      _
    %657 = vsyncpa [#allocation3], 1
    %s658 = scalar_lea.sflag [#allocation3], 1
    %659 = vsyncpa %s658, 1
    %660 = vsyncpa [#allocation6], 1
    %661 = vsyncpa [#allocation4], 1
    %s662 = scalar_lea.sflag [#allocation4], 1
    %663 = vsyncpa %s662, 1

</llo_original>
